<compile_context>
chip_gen: v5e
topology: v5e:2x2
jax: 0.10.0
libtpu: 0.0.40
codegen_flags: <defaults>
</compile_context>

<pallas_src>
import functools

import jax
import jax.numpy as jnp
from jax import lax
from jax.experimental import pallas as pl
from jax.experimental.pallas import tpu as pltpu

LANE = 128
SUBLANE = 8
VMEM_LIMIT = 48 * 1024 * 1024  # safe on v7x (64 MiB physical); v5e/v6e could go higher


def _round_up(x, m):
    return ((x + m - 1) // m) * m


def _pad2d(x, rows, cols, dtype=None):
    r, c = x.shape
    out = jnp.pad(x, ((0, rows - r), (0, cols - c)))
    if dtype is not None and out.dtype != dtype:
        out = out.astype(dtype)
    return out


def _pick_batch_tile(n, max_tile):
    """Row tile: multiple of 8, <= max_tile, and (when the batch allows it) small
    enough that the 'parallel' grid axis has >= 2 steps, so both v7x TensorCores
    get work (free on v5e/v6e, up to ~2x on v7x)."""
    n_pad = _round_up(n, SUBLANE)
    if n_pad <= SUBLANE:
        return SUBLANE
    two_step = _round_up(n_pad // 2, SUBLANE)
    return max(SUBLANE, min(max_tile, two_step))


# ----------------------------------------------------------------------------
# Fused encoder + classifier kernel
# ----------------------------------------------------------------------------
def encoder_cls_kernel(x_ref, w1_ref, b1_ref, w2_ref, b2_ref, wc_ref, bc_ref,
                       rep_ref, logits_ref):
    """rep = relu(x @ W1 + b1) @ W2 + b2 ; logits = rep @ Wc + bc."""
    x = x_ref[...]  # bf16 tile [tile_n, in_p]
    h = jnp.dot(x, w1_ref[...], preferred_element_type=jnp.float32) + b1_ref[...]
    h = jnp.maximum(h, 0.0)  # f32 elementwise (v5e-safe)
    rep = jnp.dot(h.astype(jnp.bfloat16), w2_ref[...],
                  preferred_element_type=jnp.float32) + b2_ref[...]
    rep_ref[...] = rep.astype(rep_ref.dtype)  # bf16 writeback (halves HBM traffic)
    logits = jnp.dot(rep.astype(jnp.bfloat16), wc_ref[...],
                     preferred_element_type=jnp.float32) + bc_ref[...]
    logits_ref[...] = logits.astype(logits_ref.dtype)


def encode_and_classify(x, params, *, tile_n=256):
    """One pallas_call producing (rep_padded bf16, logits_padded f32); batch-tiled grid."""
    w1, b1 = params["w1"], params["b1"]
    w2, b2 = params["w2"], params["b2"]
    wc, bc = params["wc"], params["bc"]

    n = x.shape[0]
    in_p, hid_p = w1.shape
    rep_p = w2.shape[1]
    cls_p = wc.shape[1]

    tile_n = _pick_batch_tile(n, tile_n)
    n_p = _round_up(n, tile_n)
    x_p = _pad2d(x, n_p, in_p, jnp.bfloat16)

    full = lambda shape: pl.BlockSpec(shape, lambda i: (0,) * len(shape))
    rows = lambda cols: pl.BlockSpec((tile_n, cols), lambda i: (i, 0))
    # TODO(synk): for large in_dim/hidden on v7x (64 MiB VMEM) mark the loop-invariant
    # weight specs pipeline_mode=pl.Buffered(1) (no double buffer) and/or tile the
    # hidden dim; at these sizes the default double-buffered residency is far below
    # the limit, so we keep the simple full-residency specs.

    flops = 2 * n_p * (in_p * hid_p + hid_p * rep_p + rep_p * cls_p)
    bytes_accessed = (x_p.size * 2
                      + (w1.size + w2.size + wc.size) * 2
                      + (b1.size + b2.size + bc.size) * 4
                      + n_p * rep_p * 2 + n_p * cls_p * 4)

    rep_out, logits_out = pl.pallas_call(
        encoder_cls_kernel,
        out_shape=(jax.ShapeDtypeStruct((n_p, rep_p), jnp.bfloat16),
                   jax.ShapeDtypeStruct((n_p, cls_p), jnp.float32)),
        grid=(n_p // tile_n,),
        in_specs=[rows(in_p), full(w1.shape), full(b1.shape),
                  full(w2.shape), full(b2.shape), full(wc.shape), full(bc.shape)],
        out_specs=(rows(rep_p), rows(cls_p)),
        compiler_params=pltpu.CompilerParams(
            dimension_semantics=("parallel",),
            vmem_limit_bytes=VMEM_LIMIT),
        cost_estimate=pl.CostEstimate(flops=flops, transcendentals=0,
                                      bytes_accessed=bytes_accessed),
    )(x_p, w1, b1, w2, b2, wc, bc)
    return rep_out, logits_out


# ----------------------------------------------------------------------------
# One-shot L2 row normalization (hoisted out of the snn kv loop)
# ----------------------------------------------------------------------------
def l2norm_kernel(x_ref, out_ref, *, scale):
    x = x_ref[...].astype(jnp.float32)
    # F.normalize(x, dim=1): x / max(||x||, 1e-12) == x * rsqrt(max(||x||^2, 1e-24)).
    # rsqrt runs on the EUP; `scale` folds the SNN 1/tau into the query side.
    inv = lax.rsqrt(jnp.maximum(jnp.sum(x * x, axis=1, keepdims=True), 1e-24))
    out_ref[...] = (x * (inv * scale)).astype(out_ref.dtype)


def l2_normalize_rows(x_p, *, scale, block_rows, out_dtype=jnp.bfloat16):
    rows, cols = x_p.shape
    assert rows % block_rows == 0 and cols % LANE == 0
    return pl.pallas_call(
        functools.partial(l2norm_kernel, scale=float(scale)),
        out_shape=jax.ShapeDtypeStruct((rows, cols), out_dtype),
        grid=(rows // block_rows,),
        in_specs=[pl.BlockSpec((block_rows, cols), lambda i: (i, 0))],
        out_specs=pl.BlockSpec((block_rows, cols), lambda i: (i, 0)),
        compiler_params=pltpu.CompilerParams(
            dimension_semantics=("parallel",),
            vmem_limit_bytes=VMEM_LIMIT),
    )(x_p)


# ----------------------------------------------------------------------------
# SNN pseudo-label propagation: streamed (flash-style) softmax over supports
# ----------------------------------------------------------------------------
def snn_kernel(q_ref, st_ref, lab_ref, out_ref, m_sc, l_sc, acc_sc, *,
               n_supports, tile_m, m_padded):
    kv = pl.program_id(1)

    @pl.when(kv == 0)
    def _():
        m_sc[...] = jnp.full(m_sc.shape, -jnp.inf, m_sc.dtype)
        l_sc[...] = jnp.zeros(l_sc.shape, l_sc.dtype)
        acc_sc[...] = jnp.zeros(acc_sc.shape, acc_sc.dtype)

    # q/st are pre-normalized bf16 (1/tau already folded into q) and st is already
    # transposed to (d, m): plain MXU matmul, no per-step normalization or rhs
    # transpose, leaving the XLU for the online-softmax max/sum below.
    logits = jnp.dot(q_ref[...], st_ref[...], preferred_element_type=jnp.float32)

    if m_padded != n_supports:
        # Only the last kv block carries zero-padded supports; mask them to -inf so
        # no probability mass leaks.  Grid-invariant iota + one scalar subtraction.
        # round_up padding guarantees m_padded - n_supports < tile_m, so every block
        # keeps >= 1 finite column (no all--inf row -> no NaN alpha).
        limit = n_supports - kv * tile_m
        col = lax.broadcasted_iota(jnp.int32, logits.shape, 1)
        logits = jnp.where(col < limit, logits, -jnp.inf)

    m_prev = m_sc[...]
    m_new = jnp.maximum(m_prev, jnp.max(logits, axis=1, keepdims=True))
    alpha = jnp.exp(m_prev - m_new)
    p = jnp.exp(logits - m_new)
    l_sc[...] = alpha * l_sc[...] + jnp.sum(p, axis=1, keepdims=True)
    acc_sc[...] = alpha * acc_sc[...] + jnp.dot(p.astype(jnp.bfloat16), lab_ref[...],
                                                preferred_element_type=jnp.float32)
    m_sc[...] = m_new

    @pl.when(kv == pl.num_programs(1) - 1)
    def _():
        # Exact normalization: runs once per query tile, so the divide is negligible.
        out_ref[...] = (acc_sc[...] / l_sc[...]).astype(out_ref.dtype)


def snn_forward(query, supports, labels, tau, *, tile_n=256, tile_m=512):
    n, d = query.shape
    m, d2 = supports.shape
    m2, c = labels.shape
    assert d == d2 and m == m2

    d_p = _round_up(d, LANE)
    c_p = _round_up(c, LANE)
    tile_n = _pick_batch_tile(n, tile_n)
    tile_m = min(tile_m, _round_up(m, LANE))  # lane dim of the s.T block -> x128
    n_p = _round_up(n, tile_n)
    m_p = _round_up(m, tile_m)
    assert m_p - m < tile_m  # last kv block always keeps valid supports (no NaN)

    # bf16 streaming of the kv-axis operands (labels are one-hot -> exact in bf16);
    # bf16 similarity diverges ~1e-2 rel. from the f32 PyTorch cosine path — fine
    # for pseudo-labeling.
    q_p = _pad2d(query, n_p, d_p)
    s_p = _pad2d(supports, m_p, d_p)
    lab_p = _pad2d(labels, m_p, c_p, jnp.bfloat16)

    # Hoist F.normalize (+ the 1/tau fold) out of the kv loop: one-shot pre-pass,
    # bf16 outputs.  Supports are transposed once so the streamed matmul needs no
    # per-step rhs transpose.
    q_n = l2_normalize_rows(q_p, scale=1.0 / tau, block_rows=tile_n)
    s_n = l2_normalize_rows(s_p, scale=1.0, block_rows=tile_m)
    s_nt = s_n.T  # (d_p, m_p), one-time transpose outside the kv loop

    kernel = functools.partial(snn_kernel, n_supports=m, tile_m=tile_m, m_padded=m_p)

    flops = 2 * n_p * m_p * (d_p + c_p)
    bytes_accessed = (q_n.size + s_nt.size + lab_p.size) * 2 + n_p * c_p * 4

    out_p = pl.pallas_call(
        kernel,
        out_shape=jax.ShapeDtypeStruct((n_p, c_p), jnp.float32),
        grid=(n_p // tile_n, m_p // tile_m),
        in_specs=[pl.BlockSpec((tile_n, d_p), lambda i, j: (i, 0)),
                  pl.BlockSpec((d_p, tile_m), lambda i, j: (0, j)),
                  pl.BlockSpec((tile_m, c_p), lambda i, j: (j, 0))],
        out_specs=pl.BlockSpec((tile_n, c_p), lambda i, j: (i, 0)),
        scratch_shapes=[pltpu.VMEM((tile_n, 1), jnp.float32),     # running max
                        pltpu.VMEM((tile_n, 1), jnp.float32),     # running sum
                        pltpu.VMEM((tile_n, c_p), jnp.float32)],  # accumulator
        compiler_params=pltpu.CompilerParams(
            dimension_semantics=("parallel", "arbitrary"),
            vmem_limit_bytes=VMEM_LIMIT),
        cost_estimate=pl.CostEstimate(flops=flops, transcendentals=n_p * m_p,
                                      bytes_accessed=bytes_accessed),
    )(q_n, s_nt, lab_p)
    return out_p[:n, :c]


# ----------------------------------------------------------------------------
# Module wrapper
# ----------------------------------------------------------------------------
class TGCL:
    """JAX/Pallas port of the PyTorch TGCL wrapper (forward / cls / snn)."""

    def __init__(self, params, num_unique_labels, rep_dim, tau=0.1, thres=0.9, flag=1):
        self.params = params
        self.tau = tau
        self.thres = thres
        self.num_unique_labels = num_unique_labels
        self.rep_dim = rep_dim
        self.flag = flag

    def forward(self, x):
        # Both branches of the PyTorch `if self.flag` are identical.
        rep_p, _ = encode_and_classify(x, self.params)
        return rep_p[:x.shape[0], :self.rep_dim]

    def cls(self, x):
        # Classifier is fused into the encoder kernel -> single launch, no recompute.
        _, logits_p = encode_and_classify(x, self.params)
        return logits_p[:x.shape[0], :self.num_unique_labels]

    def encode_cls(self, x):
        rep_p, logits_p = encode_and_classify(x, self.params)
        n = x.shape[0]
        return (rep_p[:n, :self.rep_dim],
                logits_p[:n, :self.num_unique_labels])

    def snn(self, query, supports, labels):
        return snn_forward(query, supports, labels, self.tau)

    # TODO(synk): loss / loss_infomax involve data-dependent boolean indexing
    # (targets1[indices1]) and training-only reductions; kept out of the kernels.


# ----------------------------------------------------------------------------
# Deterministic parameter init (weights stored pre-transposed, zero-padded to
# 128-lane multiples, bf16 for MXU operands; biases f32)
# ----------------------------------------------------------------------------
def init_params(key, in_dim, hidden, rep_dim, num_cls):
    k1, k2, k3 = jax.random.split(key, 3)
    in_p, hid_p = _round_up(in_dim, LANE), _round_up(hidden, LANE)
    rep_p, cls_p = _round_up(rep_dim, LANE), _round_up(num_cls, LANE)
    s1 = 1.0 / jnp.sqrt(in_dim)
    s2 = 1.0 / jnp.sqrt(hidden)
    s3 = 1.0 / jnp.sqrt(rep_dim)
    w1 = jax.random.uniform(k1, (in_dim, hidden), jnp.float32, -s1, s1)
    w2 = jax.random.uniform(k2, (hidden, rep_dim), jnp.float32, -s2, s2)
    wc = jax.random.uniform(k3, (rep_dim, num_cls), jnp.float32, -s3, s3)
    return {
        "w1": _pad2d(w1, in_p, hid_p, jnp.bfloat16),
        "b1": jnp.zeros((1, hid_p), jnp.float32),
        "w2": _pad2d(w2, hid_p, rep_p, jnp.bfloat16),
        "b2": jnp.zeros((1, rep_p), jnp.float32),
        "wc": _pad2d(wc, rep_p, cls_p, jnp.bfloat16),
        "bc": jnp.zeros((1, cls_p), jnp.float32),
    }


if __name__ == "__main__":
    key = jax.random.PRNGKey(0)
    kx, ks, kp = jax.random.split(key, 3)

    N, IN_DIM, HIDDEN, REP_DIM, NUM_CLS, M = 8, 32, 64, 32, 4, 12

    params = init_params(kp, IN_DIM, HIDDEN, REP_DIM, NUM_CLS)
    model = TGCL(params, num_unique_labels=NUM_CLS, rep_dim=REP_DIM,
                 tau=0.1, thres=0.9, flag=1)

    # node features [N, F] and support features [M, F]
    x = jax.random.normal(kx, (N, IN_DIM), jnp.float32)
    supports_x = jax.random.normal(ks, (M, IN_DIM), jnp.float32)
    # one-hot support labels [M, num_unique_labels]
    labels = jax.nn.one_hot(jnp.arange(M) % NUM_CLS, NUM_CLS, dtype=jnp.float32)

    # Batch the query batch and the support batch into ONE fused encoder launch
    # (weights DMA'd once), then split the outputs.
    x_all = jnp.concatenate([x, supports_x], axis=0)
    rep_all, logits_all = model.encode_cls(x_all)
    rep, logits = rep_all[:N], logits_all[:N]
    support_rep = rep_all[N:]

    # snn pseudo-label propagation (pre-normalized bf16 inputs, streamed online softmax)
    probs = model.snn(rep, support_rep, labels)

    jax.block_until_ready((rep, logits, probs))

    assert rep.shape == (N, REP_DIM)
    assert logits.shape == (N, NUM_CLS)
    assert probs.shape == (N, NUM_CLS)
    assert bool(jnp.all(jnp.isfinite(probs)))
    # rows are convex combinations of one-hot labels -> sum to ~1
    # (bf16 probability/label matmul -> small rounding tolerance)
    assert jnp.allclose(jnp.sum(probs, axis=1), 1.0, atol=5e-3)

    print("KERNEL_OK")
</pallas_src>

<mosaic_0001>
module attributes {stable_mosaic.version = 11 : i64} {
  func.func @encoder_cls_kernel(%arg0: i32, %arg1: memref<16x128xbf16, #tpu.memory_space<vmem>>, %arg2: memref<128x128xbf16, #tpu.memory_space<vmem>>, %arg3: memref<1x128xf32, #tpu.memory_space<vmem>>, %arg4: memref<128x128xbf16, #tpu.memory_space<vmem>>, %arg5: memref<1x128xf32, #tpu.memory_space<vmem>>, %arg6: memref<128x128xbf16, #tpu.memory_space<vmem>>, %arg7: memref<1x128xf32, #tpu.memory_space<vmem>>, %arg8: memref<16x128xbf16, #tpu.memory_space<vmem>>, %arg9: memref<16x128xf32, #tpu.memory_space<vmem>>) attributes {dimension_semantics = [#tpu.dimension_semantics<parallel>], iteration_bounds = array<i64: 2>, scalar_prefetch = 0 : i64, scratch_operands = 0 : i64, tpu.core_type = #tpu.core_type<tc>, window_params = [{transform_indices = @transform_0, window_bounds = array<i64: 16, 128>}, {pipeline_mode = #tpu.pipeline_mode<synchronous>, transform_indices = @transform_1, window_bounds = array<i64: 128, 128>}, {pipeline_mode = #tpu.pipeline_mode<synchronous>, transform_indices = @transform_2, window_bounds = array<i64: 1, 128>}, {pipeline_mode = #tpu.pipeline_mode<synchronous>, transform_indices = @transform_3, window_bounds = array<i64: 128, 128>}, {pipeline_mode = #tpu.pipeline_mode<synchronous>, transform_indices = @transform_4, window_bounds = array<i64: 1, 128>}, {pipeline_mode = #tpu.pipeline_mode<synchronous>, transform_indices = @transform_5, window_bounds = array<i64: 128, 128>}, {pipeline_mode = #tpu.pipeline_mode<synchronous>, transform_indices = @transform_6, window_bounds = array<i64: 1, 128>}, {transform_indices = @transform_7, window_bounds = array<i64: 16, 128>}, {transform_indices = @transform_8, window_bounds = array<i64: 16, 128>}]} {
    %c0 = arith.constant 0 : index
    %c0_0 = arith.constant 0 : index
    %0 = vector.load %arg1[%c0, %c0_0] : memref<16x128xbf16, #tpu.memory_space<vmem>>, vector<16x128xbf16>
    %c0_1 = arith.constant 0 : index
    %c0_2 = arith.constant 0 : index
    %1 = vector.load %arg2[%c0_1, %c0_2] : memref<128x128xbf16, #tpu.memory_space<vmem>>, vector<128x128xbf16>
    %cst = arith.constant dense<0.000000e+00> : vector<16x128xf32>
    %2 = tpu.matmul %0, %1, %cst {dimension_numbers = #tpu.dot_dimension_numbers<[1], [0], [0], [1], [0, 0, 1, 1], [], []>} : vector<16x128xbf16>, vector<128x128xbf16>, vector<16x128xf32> -> vector<16x128xf32>
    %c0_3 = arith.constant 0 : index
    %c0_4 = arith.constant 0 : index
    %3 = vector.load %arg3[%c0_3, %c0_4] : memref<1x128xf32, #tpu.memory_space<vmem>>, vector<1x128xf32>
    %4 = vector.broadcast %3 : vector<1x128xf32> to vector<16x128xf32>
    %5 = arith.addf %2, %4 : vector<16x128xf32>
    %cst_5 = arith.constant 0.000000e+00 : f32
    %6 = vector.broadcast %cst_5 : f32 to vector<16x128xf32>
    %7 = arith.maximumf %5, %6 : vector<16x128xf32>
    %8 = arith.truncf %7 : vector<16x128xf32> to vector<16x128xbf16>
    %c0_6 = arith.constant 0 : index
    %c0_7 = arith.constant 0 : index
    %9 = vector.load %arg4[%c0_6, %c0_7] : memref<128x128xbf16, #tpu.memory_space<vmem>>, vector<128x128xbf16>
    %cst_8 = arith.constant dense<0.000000e+00> : vector<16x128xf32>
    %10 = tpu.matmul %8, %9, %cst_8 {dimension_numbers = #tpu.dot_dimension_numbers<[1], [0], [0], [1], [0, 0, 1, 1], [], []>} : vector<16x128xbf16>, vector<128x128xbf16>, vector<16x128xf32> -> vector<16x128xf32>
    %c0_9 = arith.constant 0 : index
    %c0_10 = arith.constant 0 : index
    %11 = vector.load %arg5[%c0_9, %c0_10] : memref<1x128xf32, #tpu.memory_space<vmem>>, vector<1x128xf32>
    %12 = vector.broadcast %11 : vector<1x128xf32> to vector<16x128xf32>
    %13 = arith.addf %10, %12 : vector<16x128xf32>
    %14 = arith.truncf %13 : vector<16x128xf32> to vector<16x128xbf16>
    %c0_11 = arith.constant 0 : index
    %c0_12 = arith.constant 0 : index
    %15 = vector.load %arg8[%c0_11, %c0_12] : memref<16x128xbf16, #tpu.memory_space<vmem>>, vector<16x128xbf16>
    tpu.vector_store %arg8[%c0_11, %c0_12], %14 {strides = array<i32>} : memref<16x128xbf16, #tpu.memory_space<vmem>>, vector<16x128xbf16>,
    %16 = arith.truncf %13 : vector<16x128xf32> to vector<16x128xbf16>
    %c0_13 = arith.constant 0 : index
    %c0_14 = arith.constant 0 : index
    %17 = vector.load %arg6[%c0_13, %c0_14] : memref<128x128xbf16, #tpu.memory_space<vmem>>, vector<128x128xbf16>
    %cst_15 = arith.constant dense<0.000000e+00> : vector<16x128xf32>
    %18 = tpu.matmul %16, %17, %cst_15 {dimension_numbers = #tpu.dot_dimension_numbers<[1], [0], [0], [1], [0, 0, 1, 1], [], []>} : vector<16x128xbf16>, vector<128x128xbf16>, vector<16x128xf32> -> vector<16x128xf32>
    %c0_16 = arith.constant 0 : index
    %c0_17 = arith.constant 0 : index
    %19 = vector.load %arg7[%c0_16, %c0_17] : memref<1x128xf32, #tpu.memory_space<vmem>>, vector<1x128xf32>
    %20 = vector.broadcast %19 : vector<1x128xf32> to vector<16x128xf32>
    %21 = arith.addf %18, %20 : vector<16x128xf32>
    %c0_18 = arith.constant 0 : index
    %c0_19 = arith.constant 0 : index
    %22 = vector.load %arg9[%c0_18, %c0_19] : memref<16x128xf32, #tpu.memory_space<vmem>>, vector<16x128xf32>
    tpu.vector_store %arg9[%c0_18, %c0_19], %21 {strides = array<i32>} : memref<16x128xf32, #tpu.memory_space<vmem>>, vector<16x128xf32>,
    return
  }
  func.func @transform_0(%arg0: i32) -> (i32, i32) {
    %c0_i32 = arith.constant 0 : i32
    %c0_i32_0 = arith.constant 0 : i32
    return %arg0, %c0_i32 : i32, i32
  }
  func.func @transform_1(%arg0: i32) -> (i32, i32) {
    %c0_i32 = arith.constant 0 : i32
    %c0_i32_0 = arith.constant 0 : i32
    %c0_i32_1 = arith.constant 0 : i32
    return %c0_i32, %c0_i32_0 : i32, i32
  }
  func.func @transform_2(%arg0: i32) -> (i32, i32) {
    %c0_i32 = arith.constant 0 : i32
    %c0_i32_0 = arith.constant 0 : i32
    %c0_i32_1 = arith.constant 0 : i32
    return %c0_i32, %c0_i32_0 : i32, i32
  }
  func.func @transform_3(%arg0: i32) -> (i32, i32) {
    %c0_i32 = arith.constant 0 : i32
    %c0_i32_0 = arith.constant 0 : i32
    %c0_i32_1 = arith.constant 0 : i32
    return %c0_i32, %c0_i32_0 : i32, i32
  }
  func.func @transform_4(%arg0: i32) -> (i32, i32) {
    %c0_i32 = arith.constant 0 : i32
    %c0_i32_0 = arith.constant 0 : i32
    %c0_i32_1 = arith.constant 0 : i32
    return %c0_i32, %c0_i32_0 : i32, i32
  }
  func.func @transform_5(%arg0: i32) -> (i32, i32) {
    %c0_i32 = arith.constant 0 : i32
    %c0_i32_0 = arith.constant 0 : i32
    %c0_i32_1 = arith.constant 0 : i32
    return %c0_i32, %c0_i32_0 : i32, i32
  }
  func.func @transform_6(%arg0: i32) -> (i32, i32) {
    %c0_i32 = arith.constant 0 : i32
    %c0_i32_0 = arith.constant 0 : i32
    %c0_i32_1 = arith.constant 0 : i32
    return %c0_i32, %c0_i32_0 : i32, i32
  }
  func.func @transform_7(%arg0: i32) -> (i32, i32) {
    %c0_i32 = arith.constant 0 : i32
    %c0_i32_0 = arith.constant 0 : i32
    return %arg0, %c0_i32 : i32, i32
  }
  func.func @transform_8(%arg0: i32) -> (i32, i32) {
    %c0_i32 = arith.constant 0 : i32
    %c0_i32_0 = arith.constant 0 : i32
    return %arg0, %c0_i32 : i32, i32
  }
}

</mosaic_0001>

<llo_original>
// kernel: tpu_custom_call.1
$region0: #{tpu_custom_call.1}
  #allocation0 [shape = 'u32[]', space=smem, size = 0x4, offset = 0x4, fixed_abs, tag = 'smem constant byte address 0x4 - core index']
  #allocation1 [shape = 'u32[72,128]{1,0:T(1,128)}', space=vmem, size = 0x9000, scoped, tag = 'internal scratch']
  %s0 = inlined_call_operand.hbm [shape: bf16[32,128], index: 0, kind: input, shape index: {}]
  %s1 = inlined_call_operand.hbm [shape: bf16[128,128], index: 1, kind: input, shape index: {}]
  %s2 = inlined_call_operand.vmem [shape: f32[1,128], index: 2, kind: input, shape index: {}]
  %s3 = inlined_call_operand.hbm [shape: bf16[128,128], index: 3, kind: input, shape index: {}]
  %s4 = inlined_call_operand.vmem [shape: f32[1,128], index: 4, kind: input, shape index: {}]
  %s5 = inlined_call_operand.hbm [shape: bf16[128,128], index: 5, kind: input, shape index: {}]
  %s6 = inlined_call_operand.vmem [shape: f32[1,128], index: 6, kind: input, shape index: {}]
  %s7 = inlined_call_operand.hbm [shape: bf16[32,128], index: 7, kind: output, shape index: {0}]
  %s8 = inlined_call_operand.hbm [shape: f32[32,128], index: 8, kind: output, shape index: {1}]
  %9 = xla_tuple %s7, %s8
  %s10 = sld [smem:[#allocation0]]
  $region85: #{tpu_custom_call.1} parent=0
    _
  %s12 = ssub.s32 1, %s10
  %s13 = scalar_select 0, %s12, %s10
  $region1: #{tpu_custom_call.1} parent=0
    #allocation2 [shape = 'u8[8192]{0}', space=vmem, size = 0x2000, scoped, tag = 'input window, operand 0']
    #allocation3 [shape = 's32[2]{0}', space=sflag, size = 0x8, scoped, tag = 'scoped memory for tpu_custom_call.1']
    #allocation4 [shape = 's32[2]{0}', space=sflag, size = 0x8, scoped, tag = 'scoped memory for tpu_custom_call.1']
    #allocation5 [shape = 'u8[32768]{0}', space=vmem, size = 0x8000, scoped, tag = 'input window, operand 1, single buffered']
    #allocation6 [shape = 's32[1]{0}', space=sflag, size = 0x4, scoped, tag = 'scoped memory for tpu_custom_call.1']
    #allocation7 [shape = 'u8[32768]{0}', space=vmem, size = 0x8000, scoped, tag = 'input window, operand 3, single buffered']
    #allocation8 [shape = 'u8[32768]{0}', space=vmem, size = 0x8000, scoped, tag = 'input window, operand 5, single buffered']
    #allocation9 [shape = 's32[1]{0}', space=sflag, size = 0x4, scoped, tag = 'scoped memory for tpu_custom_call.1']
    #allocation10 [shape = 'u8[8192]{0}', space=vmem, size = 0x2000, scoped, tag = 'output window, operand 0']
    #allocation11 [shape = 'u8[16384]{0}', space=vmem, size = 0x4000, scoped, tag = 'output window, operand 1']
    #allocation12 [shape = 's32[2]{0}', space=sflag, size = 0x8, scoped, tag = 'scoped memory for tpu_custom_call.1']
    %14 = vsyncpa [#allocation3], 0
    %s15 = scalar_lea.sflag [#allocation3], 1
    %16 = vsyncpa %s15, 0
    %17 = vsyncpa [#allocation6], 0
    %18 = vsyncpa [#allocation9], 0
    %19 = vsyncpa [#allocation4], 0
    %s20 = scalar_lea.sflag [#allocation4], 1
    %21 = vsyncpa %s20, 0
    %22 = vsyncpa [#allocation12], 0
    %s23 = scalar_lea.sflag [#allocation12], 1
    %24 = vsyncpa %s23, 0
    loop: start=0, step=1, limit=4
    $region2: #{tpu_custom_call.1} parent=1 // loop_pre_header
      _
    $region3: #{tpu_custom_call.1} parent=1 // loop_header
      %s26 = sphi 0, %s30
      %p27 = scmp.ge.s32.totalorder %s26, 4
      %s36 = sphi 0, %s38
      %s39 = sphi 0, %s36
      %s40 = sphi 0, %s39
      %s56 = sphi 0, %s40
      %s60 = sphi 0, %s60
      %s62 = sphi 0, %s60
      %s63 = sphi 0, %s62
      %s77 = sphi 0, %s63
      %s81 = sphi 0, %s81
      %s83 = sphi 0, %s81
      %s84 = sphi 0, %s83
      %s98 = sphi 0, %s84
      %s102 = sphi 0, %s102
      %s104 = sphi 0, %s102
      %s105 = sphi 0, %s104
      %s119 = sphi 0, %s105
      %s123 = sphi 0, %s123
      %s125 = sphi 0, %s123
      %s126 = sphi 0, %s125
      %s140 = sphi 0, %s126
      %s144 = sphi 0, %s144
      %s146 = sphi 0, %s144
      %s147 = sphi 0, %s146
      %s161 = sphi 0, %s147
      %s165 = sphi 0, %s165
      %s167 = sphi 0, %s165
      %s168 = sphi 0, %s167
      %s182 = sphi 0, %s168
      %s188 = sphi 0, %s190
      %s191 = sphi 0, %s188
      %s192 = sphi 0, %s191
      %s208 = sphi 0, %s192
      %s214 = sphi 0, %s216
      %s217 = sphi 0, %s214
      %s218 = sphi 0, %s217
      %s234 = sphi 0, %s218
    $region4: #{tpu_custom_call.1} parent=1 // loop_header_branch
      %29 = sbr.rel (%p27) target = $region8
    $region5: #{tpu_custom_call.1} parent=1 // loop_body
      %s31 = ssub.s32 %s26, 1
      %s32 = ssub.s32 %s26, 2
      %s33 = sadd.s32 %s26, 1
      %s34 = ssub.s32 %s26, %s33
      %p35 = scmp.eq.s32.totalorder %s34, 0
      %s37 = sadd.s32 %s36, 1
      %s38 = scalar_select %p35, %s36, %s37
      %p41 = pneg %p35
      %p42 = scmp.eq.s32.totalorder %s26, 1
      %p43 = por %p41, %p42
      %p44 = scmp.ne.s32.totalorder %s36, %s39
      %p45 = scmp.eq.s32.totalorder %s26, 0
      %p46 = por %p44, %p45
      %p47 = scmp.ne.s32.totalorder %s36, %s39
      %p48 = scmp.eq.s32.totalorder %s31, 1
      %p49 = por %p47, %p48
      %p50 = scmp.ne.s32.totalorder %s39, %s40
      %p51 = scmp.eq.s32.totalorder %s31, 0
      %p52 = por %p50, %p51
      %p53 = scmp.ne.s32.totalorder %s39, %s40
      %p54 = scmp.eq.s32.totalorder %s32, 1
      %p55 = por %p53, %p54
      %p57 = scmp.ne.s32.totalorder %s40, %s56
      %p58 = scmp.eq.s32.totalorder %s32, 0
      %p59 = por %p57, %p58
      %s61 = sadd.s32 %s60, 1
      %p64 = scmp.eq.s32.totalorder %s26, 1
      %p65 = scmp.ne.s32.totalorder %s60, %s62
      %p66 = scmp.eq.s32.totalorder %s26, 0
      %p67 = por %p65, %p66
      %p68 = scmp.ne.s32.totalorder %s60, %s62
      %p69 = scmp.eq.s32.totalorder %s31, 1
      %p70 = por %p68, %p69
      %p71 = scmp.ne.s32.totalorder %s62, %s63
      %p72 = scmp.eq.s32.totalorder %s31, 0
      %p73 = por %p71, %p72
      %p74 = scmp.ne.s32.totalorder %s62, %s63
      %p75 = scmp.eq.s32.totalorder %s32, 1
      %p76 = por %p74, %p75
      %p78 = scmp.ne.s32.totalorder %s63, %s77
      %p79 = scmp.eq.s32.totalorder %s32, 0
      %p80 = por %p78, %p79
      %s82 = sadd.s32 %s81, 1
      %p85 = scmp.eq.s32.totalorder %s26, 1
      %p86 = scmp.ne.s32.totalorder %s81, %s83
      %p87 = scmp.eq.s32.totalorder %s26, 0
      %p88 = por %p86, %p87
      %p89 = scmp.ne.s32.totalorder %s81, %s83
      %p90 = scmp.eq.s32.totalorder %s31, 1
      %p91 = por %p89, %p90
      %p92 = scmp.ne.s32.totalorder %s83, %s84
      %p93 = scmp.eq.s32.totalorder %s31, 0
      %p94 = por %p92, %p93
      %p95 = scmp.ne.s32.totalorder %s83, %s84
      %p96 = scmp.eq.s32.totalorder %s32, 1
      %p97 = por %p95, %p96
      %p99 = scmp.ne.s32.totalorder %s84, %s98
      %p100 = scmp.eq.s32.totalorder %s32, 0
      %p101 = por %p99, %p100
      %s103 = sadd.s32 %s102, 1
      %p106 = scmp.eq.s32.totalorder %s26, 1
      %p107 = scmp.ne.s32.totalorder %s102, %s104
      %p108 = scmp.eq.s32.totalorder %s26, 0
      %p109 = por %p107, %p108
      %p110 = scmp.ne.s32.totalorder %s102, %s104
      %p111 = scmp.eq.s32.totalorder %s31, 1
      %p112 = por %p110, %p111
      %p113 = scmp.ne.s32.totalorder %s104, %s105
      %p114 = scmp.eq.s32.totalorder %s31, 0
      %p115 = por %p113, %p114
      %p116 = scmp.ne.s32.totalorder %s104, %s105
      %p117 = scmp.eq.s32.totalorder %s32, 1
      %p118 = por %p116, %p117
      %p120 = scmp.ne.s32.totalorder %s105, %s119
      %p121 = scmp.eq.s32.totalorder %s32, 0
      %p122 = por %p120, %p121
      %s124 = sadd.s32 %s123, 1
      %p127 = scmp.eq.s32.totalorder %s26, 1
      %p128 = scmp.ne.s32.totalorder %s123, %s125
      %p129 = scmp.eq.s32.totalorder %s26, 0
      %p130 = por %p128, %p129
      %p131 = scmp.ne.s32.totalorder %s123, %s125
      %p132 = scmp.eq.s32.totalorder %s31, 1
      %p133 = por %p131, %p132
      %p134 = scmp.ne.s32.totalorder %s125, %s126
      %p135 = scmp.eq.s32.totalorder %s31, 0
      %p136 = por %p134, %p135
      %p137 = scmp.ne.s32.totalorder %s125, %s126
      %p138 = scmp.eq.s32.totalorder %s32, 1
      %p139 = por %p137, %p138
      %p141 = scmp.ne.s32.totalorder %s126, %s140
      %p142 = scmp.eq.s32.totalorder %s32, 0
      %p143 = por %p141, %p142
      %s145 = sadd.s32 %s144, 1
      %p148 = scmp.eq.s32.totalorder %s26, 1
      %p149 = scmp.ne.s32.totalorder %s144, %s146
      %p150 = scmp.eq.s32.totalorder %s26, 0
      %p151 = por %p149, %p150
      %p152 = scmp.ne.s32.totalorder %s144, %s146
      %p153 = scmp.eq.s32.totalorder %s31, 1
      %p154 = por %p152, %p153
      %p155 = scmp.ne.s32.totalorder %s146, %s147
      %p156 = scmp.eq.s32.totalorder %s31, 0
      %p157 = por %p155, %p156
      %p158 = scmp.ne.s32.totalorder %s146, %s147
      %p159 = scmp.eq.s32.totalorder %s32, 1
      %p160 = por %p158, %p159
      %p162 = scmp.ne.s32.totalorder %s147, %s161
      %p163 = scmp.eq.s32.totalorder %s32, 0
      %p164 = por %p162, %p163
      %s166 = sadd.s32 %s165, 1
      %p169 = scmp.eq.s32.totalorder %s26, 1
      %p170 = scmp.ne.s32.totalorder %s165, %s167
      %p171 = scmp.eq.s32.totalorder %s26, 0
      %p172 = por %p170, %p171
      %p173 = scmp.ne.s32.totalorder %s165, %s167
      %p174 = scmp.eq.s32.totalorder %s31, 1
      %p175 = por %p173, %p174
      %p176 = scmp.ne.s32.totalorder %s167, %s168
      %p177 = scmp.eq.s32.totalorder %s31, 0
      %p178 = por %p176, %p177
      %p179 = scmp.ne.s32.totalorder %s167, %s168
      %p180 = scmp.eq.s32.totalorder %s32, 1
      %p181 = por %p179, %p180
      %p183 = scmp.ne.s32.totalorder %s168, %s182
      %p184 = scmp.eq.s32.totalorder %s32, 0
      %p185 = por %p183, %p184
      %s186 = ssub.s32 %s26, %s33
      %p187 = scmp.eq.s32.totalorder %s186, 0
      %s189 = sadd.s32 %s188, 1
      %s190 = scalar_select %p187, %s188, %s189
      %p193 = pneg %p187
      %p194 = scmp.eq.s32.totalorder %s26, 1
      %p195 = por %p193, %p194
      %p196 = scmp.ne.s32.totalorder %s188, %s191
      %p197 = scmp.eq.s32.totalorder %s26, 0
      %p198 = por %p196, %p197
      %p199 = scmp.ne.s32.totalorder %s188, %s191
      %p200 = scmp.eq.s32.totalorder %s31, 1
      %p201 = por %p199, %p200
      %p202 = scmp.ne.s32.totalorder %s191, %s192
      %p203 = scmp.eq.s32.totalorder %s31, 0
      %p204 = por %p202, %p203
      %p205 = scmp.ne.s32.totalorder %s191, %s192
      %p206 = scmp.eq.s32.totalorder %s32, 1
      %p207 = por %p205, %p206
      %p209 = scmp.ne.s32.totalorder %s192, %s208
      %p210 = scmp.eq.s32.totalorder %s32, 0
      %p211 = por %p209, %p210
      %s212 = ssub.s32 %s26, %s33
      %p213 = scmp.eq.s32.totalorder %s212, 0
      %s215 = sadd.s32 %s214, 1
      %s216 = scalar_select %p213, %s214, %s215
      %p219 = pneg %p213
      %p220 = scmp.eq.s32.totalorder %s26, 1
      %p221 = por %p219, %p220
      %p222 = scmp.ne.s32.totalorder %s214, %s217
      %p223 = scmp.eq.s32.totalorder %s26, 0
      %p224 = por %p222, %p223
      %p225 = scmp.ne.s32.totalorder %s214, %s217
      %p226 = scmp.eq.s32.totalorder %s31, 1
      %p227 = por %p225, %p226
      %p228 = scmp.ne.s32.totalorder %s217, %s218
      %p229 = scmp.eq.s32.totalorder %s31, 0
      %p230 = por %p228, %p229
      %p231 = scmp.ne.s32.totalorder %s217, %s218
      %p232 = scmp.eq.s32.totalorder %s32, 1
      %p233 = por %p231, %p232
      %p235 = scmp.ne.s32.totalorder %s218, %s234
      %p236 = scmp.eq.s32.totalorder %s32, 0
      %p237 = por %p235, %p236
      %p238 = scmp.le.s32.totalorder 1, %s26
      %p239 = scmp.lt.s32.totalorder %s26, 3
      %p240 = pnand %p238, %p239
      %p241 = pneg %p240
      // Predicated region
      $region9: #{tpu_custom_call.1} parent=5 // pred_check
        _
      $region10: #{tpu_custom_call.1} parent=5 // pred_check_branch
        %243 = sbr.rel (%p240) target = $region12
      $region11: #{tpu_custom_call.1} parent=5 // pred_region
        %s244 = ssub.s32 %s26, 1
        // Predicated region
        $region13: #{tpu_custom_call.1} parent=11 // pred_check
          %p245 = pneg %p73
        $region14: #{tpu_custom_call.1} parent=11 // pred_check_branch
          %247 = sbr.rel (%p245) target = $region16
        $region15: #{tpu_custom_call.1} parent=11 // pred_region
          %249 = vsyncadd [#allocation6], 0
          %s250 = sshll.u32 %s1, 4
          %s251 = int_to_ptr.hbm [resolvable:$true] %s250
          %s252 = sshll.u32 [#allocation5], 4
          %s253 = int_to_ptr.vmem [resolvable:$true] %s252
          %258 = dma.hbm_to_vmem [thread:$0]  %s251, 1024, %s253, [#allocation6], 64, 64, 4
        $region16: #{tpu_custom_call.1} parent=11 // pred_fallthru
          _
        // Predicated region
        $region17: #{tpu_custom_call.1} parent=11 // pred_check
          %p259 = pneg %p94
        $region18: #{tpu_custom_call.1} parent=11 // pred_check_branch
          %261 = sbr.rel (%p259) target = $region20
        $region19: #{tpu_custom_call.1} parent=11 // pred_region
          _
        $region20: #{tpu_custom_call.1} parent=11 // pred_fallthru
          _
        // Predicated region
        $region21: #{tpu_custom_call.1} parent=11 // pred_check
          %p262 = pneg %p115
        $region22: #{tpu_custom_call.1} parent=11 // pred_check_branch
          %264 = sbr.rel (%p262) target = $region24
        $region23: #{tpu_custom_call.1} parent=11 // pred_region
          %266 = vsyncadd [#allocation6], 0
          %s267 = sshll.u32 %s3, 4
          %s268 = int_to_ptr.hbm [resolvable:$true] %s267
          %s269 = sshll.u32 [#allocation7], 4
          %s270 = int_to_ptr.vmem [resolvable:$true] %s269
          %275 = dma.hbm_to_vmem [thread:$0]  %s268, 1024, %s270, [#allocation6], 64, 64, 4
        $region24: #{tpu_custom_call.1} parent=11 // pred_fallthru
          _
        // Predicated region
        $region25: #{tpu_custom_call.1} parent=11 // pred_check
          %p276 = pneg %p136
        $region26: #{tpu_custom_call.1} parent=11 // pred_check_branch
          %278 = sbr.rel (%p276) target = $region28
        $region27: #{tpu_custom_call.1} parent=11 // pred_region
          _
        $region28: #{tpu_custom_call.1} parent=11 // pred_fallthru
          _
        // Predicated region
        $region29: #{tpu_custom_call.1} parent=11 // pred_check
          %p279 = pneg %p157
        $region30: #{tpu_custom_call.1} parent=11 // pred_check_branch
          %281 = sbr.rel (%p279) target = $region32
        $region31: #{tpu_custom_call.1} parent=11 // pred_region
          %283 = vsyncadd [#allocation9], 0
          %s284 = sshll.u32 %s5, 4
          %s285 = int_to_ptr.hbm [resolvable:$true] %s284
          %s286 = sshll.u32 [#allocation8], 4
          %s287 = int_to_ptr.vmem [resolvable:$true] %s286
          %292 = dma.hbm_to_vmem [thread:$0]  %s285, 1024, %s287, [#allocation9], 64, 64, 4
        $region32: #{tpu_custom_call.1} parent=11 // pred_fallthru
          _
        // Predicated region
        $region33: #{tpu_custom_call.1} parent=11 // pred_check
          %p293 = pneg %p178
        $region34: #{tpu_custom_call.1} parent=11 // pred_check_branch
          %295 = sbr.rel (%p293) target = $region36
        $region35: #{tpu_custom_call.1} parent=11 // pred_region
          _
        $region36: #{tpu_custom_call.1} parent=11 // pred_fallthru
          _
      $region12: #{tpu_custom_call.1} parent=5 // pred_fallthru
        _
      %p296 = scmp.lt.s32.totalorder %s26, 2
      // Predicated region
      $region37: #{tpu_custom_call.1} parent=5 // pred_check
        %p297 = pneg %p296
      $region38: #{tpu_custom_call.1} parent=5 // pred_check_branch
        %299 = sbr.rel (%p297) target = $region40
      $region39: #{tpu_custom_call.1} parent=5 // pred_region
        // Predicated region
        $region41: #{tpu_custom_call.1} parent=39 // pred_check
          %p300 = pneg %p46
        $region42: #{tpu_custom_call.1} parent=39 // pred_check_branch
          %302 = sbr.rel (%p300) target = $region44
        $region43: #{tpu_custom_call.1} parent=39 // pred_region
          %s303 = sand.u32 %s36, 1
          %s304 = scalar_lea.sflag [#allocation3], %s303
          %s305 = sand.u32 %s36, 1
          %s306 = smul.addr %s305, 8
          %s307 = scalar_lea.vmem [#allocation2], %s306
          %s308 = smul.u32 2, %s26
          %310 = vsyncadd %s304, 0
          %s311 = smul.addr %s308, 4
          %s312 = scalar_lea.hbm %s0, %s311
          %s313 = sshll.u32 %s312, 4
          %s314 = int_to_ptr.hbm [resolvable:$true] %s313
          %s315 = sshll.u32 %s307, 4
          %s316 = int_to_ptr.vmem [resolvable:$true] %s315
          %321 = dma.hbm_to_vmem [thread:$0]  %s314, 128, %s316, %s304, 64, 64, 4
        $region44: #{tpu_custom_call.1} parent=39 // pred_fallthru
          _
      $region40: #{tpu_custom_call.1} parent=5 // pred_fallthru
        _
      %p322 = scmp.le.s32.totalorder 1, %s26
      %p323 = scmp.lt.s32.totalorder %s26, 3
      %p324 = pnand %p322, %p323
      %p325 = pneg %p324
      // Predicated region
      $region45: #{tpu_custom_call.1} parent=5 // pred_check
        _
      $region46: #{tpu_custom_call.1} parent=5 // pred_check_branch
        %327 = sbr.rel (%p324) target = $region48
      $region47: #{tpu_custom_call.1} parent=5 // pred_region
        %s328 = ssub.s32 %s26, 1
        %s329 = sand.u32 %s39, 1
        %s330 = scalar_lea.sflag [#allocation3], %s329
        %s331 = sand.u32 %s39, 1
        %s332 = smul.addr %s331, 8
        %s333 = scalar_lea.vmem [#allocation2], %s332
        // Predicated region
        $region49: #{tpu_custom_call.1} parent=47 // pred_check
          %p334 = pneg %p52
        $region50: #{tpu_custom_call.1} parent=47 // pred_check_branch
          %336 = sbr.rel (%p334) target = $region52
        $region51: #{tpu_custom_call.1} parent=47 // pred_region
          %338 = dma.done %s330, 128
        $region52: #{tpu_custom_call.1} parent=47 // pred_fallthru
          _
        // Predicated region
        $region53: #{tpu_custom_call.1} parent=47 // pred_check
          %p339 = pneg %p73
        $region54: #{tpu_custom_call.1} parent=47 // pred_check_branch
          %341 = sbr.rel (%p339) target = $region56
        $region55: #{tpu_custom_call.1} parent=47 // pred_region
          %343 = dma.done [#allocation6], 1024
        $region56: #{tpu_custom_call.1} parent=47 // pred_fallthru
          _
        // Predicated region
        $region57: #{tpu_custom_call.1} parent=47 // pred_check
          %p344 = pneg %p115
        $region58: #{tpu_custom_call.1} parent=47 // pred_check_branch
          %346 = sbr.rel (%p344) target = $region60
        $region59: #{tpu_custom_call.1} parent=47 // pred_region
          %348 = dma.done [#allocation6], 1024
        $region60: #{tpu_custom_call.1} parent=47 // pred_fallthru
          _
        // Predicated region
        $region61: #{tpu_custom_call.1} parent=47 // pred_check
          %p349 = pneg %p157
        $region62: #{tpu_custom_call.1} parent=47 // pred_check_branch
          %351 = sbr.rel (%p349) target = $region64
        $region63: #{tpu_custom_call.1} parent=47 // pred_region
          %353 = dma.done [#allocation9], 1024
        $region64: #{tpu_custom_call.1} parent=47 // pred_fallthru
          _
        %s354 = sand.u32 %s39, 1
        %s355 = scalar_lea.sflag [#allocation3], %s354
        %s356 = sand.u32 %s39, 1
        %s357 = smul.addr %s356, 8
        %s358 = scalar_lea.vmem [#allocation2], %s357
        %p359 = pneg %p52
        %p360 = pneg %p49
        %p361 = pneg %p73
        %p362 = pneg %p70
        %p363 = pneg %p94
        %p364 = pneg %p91
        %p365 = pneg %p115
        %p366 = pneg %p112
        %p367 = pneg %p136
        %p368 = pneg %p133
        %p369 = pneg %p157
        %p370 = pneg %p154
        %p371 = pneg %p178
        %p372 = pneg %p175
        %p373 = pneg %p204
        %p374 = pneg %p201
        %s375 = sand.u32 %s191, 1
        %s376 = scalar_lea.sflag [#allocation4], %s375
        %s377 = sand.u32 %s191, 1
        %s378 = smul.addr %s377, 8
        %s379 = scalar_lea.vmem [#allocation10], %s378
        %p380 = pneg %p230
        %p381 = pneg %p227
        %s382 = sand.u32 %s217, 1
        %s383 = scalar_lea.sflag [#allocation12], %s382
        %s384 = sand.u32 %s217, 1
        %s385 = smul.addr %s384, 16
        %s386 = scalar_lea.vmem [#allocation11], %s385
        %s387 = smul.u32 2, %s31
        %s388 = smul.u32 2, %s31
        %s389 = smul.u32 2, %s31
        %v390 = vld [vmem:[%s333] sm:$0xf]
        %v391 = vld [vmem:[%s333 + $0x4] sm:$0xf]
        %v392 = vld [vmem:[#allocation5] sm:$0xf]
        %v393 = vld [vmem:[#allocation5 + $0x4] sm:$0xf]
        %v394 = vld [vmem:[#allocation5 + $0x8] sm:$0xf]
        %v395 = vld [vmem:[#allocation5 + $0xc] sm:$0xf]
        %v396 = vld [vmem:[#allocation5 + $0x10] sm:$0xf]
        %v397 = vld [vmem:[#allocation5 + $0x14] sm:$0xf]
        %v398 = vld [vmem:[#allocation5 + $0x18] sm:$0xf]
        %v399 = vld [vmem:[#allocation5 + $0x1c] sm:$0xf]
        %v400 = vld [vmem:[#allocation5 + $0x20] sm:$0xf]
        %v401 = vld [vmem:[#allocation5 + $0x24] sm:$0xf]
        %v402 = vld [vmem:[#allocation5 + $0x28] sm:$0xf]
        %v403 = vld [vmem:[#allocation5 + $0x2c] sm:$0xf]
        %v404 = vld [vmem:[#allocation5 + $0x30] sm:$0xf]
        %v405 = vld [vmem:[#allocation5 + $0x34] sm:$0xf]
        %v406 = vld [vmem:[#allocation5 + $0x38] sm:$0xf]
        %v407 = vld [vmem:[#allocation5 + $0x3c] sm:$0xf]
        %v408 = vld [vmem:[%s2] sm:$0x1]
        %v410 = vperm.slane %v408, 0
        %v414 = vunpack.c.l.b16 %v390
        %v415 = vunpack.c.l.b16 %v391
        %v416 = vpack.c.b16 %v415, %v414
        %v434 = vunpack.c.l.b16 %v392
        %v435 = vunpack.c.l.b16 %v393
        %v436 = vunpack.c.l.b16 %v394
        %v437 = vunpack.c.l.b16 %v395
        %v438 = vunpack.c.l.b16 %v396
        %v439 = vunpack.c.l.b16 %v397
        %v440 = vunpack.c.l.b16 %v398
        %v441 = vunpack.c.l.b16 %v399
        %v442 = vunpack.c.l.b16 %v400
        %v443 = vunpack.c.l.b16 %v401
        %v444 = vunpack.c.l.b16 %v402
        %v445 = vunpack.c.l.b16 %v403
        %v446 = vunpack.c.l.b16 %v404
        %v447 = vunpack.c.l.b16 %v405
        %v448 = vunpack.c.l.b16 %v406
        %v449 = vunpack.c.l.b16 %v407
        %v450 = vpack.c.b16 %v435, %v434
        %v451 = vpack.c.b16 %v437, %v436
        %v452 = vpack.c.b16 %v439, %v438
        %v453 = vpack.c.b16 %v441, %v440
        %v454 = vpack.c.b16 %v443, %v442
        %v455 = vpack.c.b16 %v445, %v444
        %v456 = vpack.c.b16 %v447, %v446
        %v457 = vpack.c.b16 %v449, %v448
        %466 = vmatpush.bf16.msra.mxu0 %v457
        %467 = vmatpush.bf16.msra.mxu0 %v456
        %468 = vmatpush.bf16.msra.mxu0 %v455
        %469 = vmatpush.bf16.msra.mxu0 %v454
        %470 = vmatpush.bf16.msra.mxu0 %v453
        %471 = vmatpush.bf16.msra.mxu0 %v452
        %472 = vmatpush.bf16.msra.mxu0 %v451
        %473 = vmatpush.bf16.msra.mxu0 %v450
        %474 = vmatmul.bf16.gmra.mxu0 %v416
        %v475 = vpop.f32.mrf.mxu0
        %v476 = vadd.f32 %v410, %v475
        %v477 = vpop.f32.mrf.mxu0
        %v478 = vadd.f32 %v410, %v477
        %479 = vdwg.mxu0
        %v480 = vmax.f32 %v476, 0.0
        %v481 = vmax.f32 %v478, 0.0
        %v482 = vpack.c.bf16 %v481, %v480
        %v483 = vld [vmem:[#allocation7] sm:$0xf]
        %v484 = vld [vmem:[#allocation7 + $0x4] sm:$0xf]
        %v485 = vld [vmem:[#allocation7 + $0x8] sm:$0xf]
        %v486 = vld [vmem:[#allocation7 + $0xc] sm:$0xf]
        %v487 = vld [vmem:[#allocation7 + $0x10] sm:$0xf]
        %v488 = vld [vmem:[#allocation7 + $0x14] sm:$0xf]
        %v489 = vld [vmem:[#allocation7 + $0x18] sm:$0xf]
        %v490 = vld [vmem:[#allocation7 + $0x1c] sm:$0xf]
        %v491 = vld [vmem:[#allocation7 + $0x20] sm:$0xf]
        %v492 = vld [vmem:[#allocation7 + $0x24] sm:$0xf]
        %v493 = vld [vmem:[#allocation7 + $0x28] sm:$0xf]
        %v494 = vld [vmem:[#allocation7 + $0x2c] sm:$0xf]
        %v495 = vld [vmem:[#allocation7 + $0x30] sm:$0xf]
        %v496 = vld [vmem:[#allocation7 + $0x34] sm:$0xf]
        %v497 = vld [vmem:[#allocation7 + $0x38] sm:$0xf]
        %v498 = vld [vmem:[#allocation7 + $0x3c] sm:$0xf]
        %v499 = vld [vmem:[%s4] sm:$0x1]
        %v501 = vperm.slane %v499, 0
        %v519 = vunpack.c.l.b16 %v483
        %v520 = vunpack.c.l.b16 %v484
        %v521 = vunpack.c.l.b16 %v485
        %v522 = vunpack.c.l.b16 %v486
        %v523 = vunpack.c.l.b16 %v487
        %v524 = vunpack.c.l.b16 %v488
        %v525 = vunpack.c.l.b16 %v489
        %v526 = vunpack.c.l.b16 %v490
        %v527 = vunpack.c.l.b16 %v491
        %v528 = vunpack.c.l.b16 %v492
        %v529 = vunpack.c.l.b16 %v493
        %v530 = vunpack.c.l.b16 %v494
        %v531 = vunpack.c.l.b16 %v495
        %v532 = vunpack.c.l.b16 %v496
        %v533 = vunpack.c.l.b16 %v497
        %v534 = vunpack.c.l.b16 %v498
        %v535 = vpack.c.b16 %v520, %v519
        %v536 = vpack.c.b16 %v522, %v521
        %v537 = vpack.c.b16 %v524, %v523
        %v538 = vpack.c.b16 %v526, %v525
        %v539 = vpack.c.b16 %v528, %v527
        %v540 = vpack.c.b16 %v530, %v529
        %v541 = vpack.c.b16 %v532, %v531
        %v542 = vpack.c.b16 %v534, %v533
        %551 = vmatpush.bf16.msra.mxu0 %v542
        %552 = vmatpush.bf16.msra.mxu0 %v541
        %553 = vmatpush.bf16.msra.mxu0 %v540
        %554 = vmatpush.bf16.msra.mxu0 %v539
        %555 = vmatpush.bf16.msra.mxu0 %v538
        %556 = vmatpush.bf16.msra.mxu0 %v537
        %557 = vmatpush.bf16.msra.mxu0 %v536
        %558 = vmatpush.bf16.msra.mxu0 %v535
        %559 = vmatmul.bf16.gmra.mxu0 %v482
        %v560 = vpop.f32.mrf.mxu0
        %v561 = vadd.f32 %v501, %v560
        %v562 = vpop.f32.mrf.mxu0
        %v563 = vadd.f32 %v501, %v562
        %564 = vdwg.mxu0
        %v565 = vpack.c.bf16 %v561, %v561
        %v566 = vpack.c.bf16 %v563, %v563
        %567 = vst [vmem:[%s379] sm:$0xf] %v565
        %568 = vst [vmem:[%s379 + $0x4] sm:$0xf] %v566
        %v569 = vld [vmem:[#allocation8] sm:$0xf]
        %v570 = vld [vmem:[#allocation8 + $0x4] sm:$0xf]
        %v571 = vld [vmem:[#allocation8 + $0x8] sm:$0xf]
        %v572 = vld [vmem:[#allocation8 + $0xc] sm:$0xf]
        %v573 = vld [vmem:[#allocation8 + $0x10] sm:$0xf]
        %v574 = vld [vmem:[#allocation8 + $0x14] sm:$0xf]
        %v575 = vld [vmem:[#allocation8 + $0x18] sm:$0xf]
        %v576 = vld [vmem:[#allocation8 + $0x1c] sm:$0xf]
        %v577 = vld [vmem:[#allocation8 + $0x20] sm:$0xf]
        %v578 = vld [vmem:[#allocation8 + $0x24] sm:$0xf]
        %v579 = vld [vmem:[#allocation8 + $0x28] sm:$0xf]
        %v580 = vld [vmem:[#allocation8 + $0x2c] sm:$0xf]
        %v581 = vld [vmem:[#allocation8 + $0x30] sm:$0xf]
        %v582 = vld [vmem:[#allocation8 + $0x34] sm:$0xf]
        %v583 = vld [vmem:[#allocation8 + $0x38] sm:$0xf]
        %v584 = vld [vmem:[#allocation8 + $0x3c] sm:$0xf]
        %v585 = vld [vmem:[%s6] sm:$0x1]
        %v587 = vperm.slane %v585, 0
        %v591 = vunpack.c.l.b16 %v565
        %v592 = vunpack.c.l.b16 %v566
        %v593 = vpack.c.b16 %v592, %v591
        %v611 = vunpack.c.l.b16 %v569
        %v612 = vunpack.c.l.b16 %v570
        %v613 = vunpack.c.l.b16 %v571
        %v614 = vunpack.c.l.b16 %v572
        %v615 = vunpack.c.l.b16 %v573
        %v616 = vunpack.c.l.b16 %v574
        %v617 = vunpack.c.l.b16 %v575
        %v618 = vunpack.c.l.b16 %v576
        %v619 = vunpack.c.l.b16 %v577
        %v620 = vunpack.c.l.b16 %v578
        %v621 = vunpack.c.l.b16 %v579
        %v622 = vunpack.c.l.b16 %v580
        %v623 = vunpack.c.l.b16 %v581
        %v624 = vunpack.c.l.b16 %v582
        %v625 = vunpack.c.l.b16 %v583
        %v626 = vunpack.c.l.b16 %v584
        %v627 = vpack.c.b16 %v612, %v611
        %v628 = vpack.c.b16 %v614, %v613
        %v629 = vpack.c.b16 %v616, %v615
        %v630 = vpack.c.b16 %v618, %v617
        %v631 = vpack.c.b16 %v620, %v619
        %v632 = vpack.c.b16 %v622, %v621
        %v633 = vpack.c.b16 %v624, %v623
        %v634 = vpack.c.b16 %v626, %v625
        %643 = vmatpush.bf16.msra.mxu0 %v634
        %644 = vmatpush.bf16.msra.mxu0 %v633
        %645 = vmatpush.bf16.msra.mxu0 %v632
        %646 = vmatpush.bf16.msra.mxu0 %v631
        %647 = vmatpush.bf16.msra.mxu0 %v630
        %648 = vmatpush.bf16.msra.mxu0 %v629
        %649 = vmatpush.bf16.msra.mxu0 %v628
        %650 = vmatpush.bf16.msra.mxu0 %v627
        %651 = vmatmul.bf16.gmra.mxu0 %v593
        %v652 = vpop.f32.mrf.mxu0
        %v653 = vadd.f32 %v587, %v652
        %v654 = vpop.f32.mrf.mxu0
        %v655 = vadd.f32 %v587, %v654
        %656 = vdwg.mxu0
        %657 = vst [vmem:[%s386] sm:$0xff] %v653
        %658 = vst [vmem:[%s386 + $0x8] sm:$0xff] %v655
        %s659 = sand.u32 %s191, 1
        %s660 = scalar_lea.sflag [#allocation4], %s659
        %s661 = sand.u32 %s191, 1
        %s662 = smul.addr %s661, 8
        %s663 = scalar_lea.vmem [#allocation10], %s662
        %s664 = sand.u32 %s217, 1
        %s665 = scalar_lea.sflag [#allocation12], %s664
        %s666 = sand.u32 %s217, 1
        %s667 = smul.addr %s666, 16
        %s668 = scalar_lea.vmem [#allocation11], %s667
        // Predicated region
        $region65: #{tpu_custom_call.1} parent=47 // pred_check
          %p669 = pneg %p201
        $region66: #{tpu_custom_call.1} parent=47 // pred_check_branch
          %671 = sbr.rel (%p669) target = $region68
        $region67: #{tpu_custom_call.1} parent=47 // pred_region
          %s672 = smul.u32 2, %s31
          %674 = vsyncadd %s660, 0
          %s675 = smul.addr %s672, 4
          %s676 = scalar_lea.hbm %s7, %s675
          %s677 = sshll.u32 %s663, 4
          %s678 = int_to_ptr.vmem [resolvable:$true] %s677
          %s679 = sshll.u32 %s676, 4
          %s680 = int_to_ptr.hbm [resolvable:$true] %s679
          %685 = dma.vmem_to_hbm [thread:$0]  %s678, 128, %s680, %s660, 64, 64, 4
        $region68: #{tpu_custom_call.1} parent=47 // pred_fallthru
          _
        // Predicated region
        $region69: #{tpu_custom_call.1} parent=47 // pred_check
          %p686 = pneg %p227
        $region70: #{tpu_custom_call.1} parent=47 // pred_check_branch
          %688 = sbr.rel (%p686) target = $region72
        $region71: #{tpu_custom_call.1} parent=47 // pred_region
          %s689 = smul.u32 2, %s31
          %691 = vsyncadd %s665, 0
          %s692 = smul.addr %s689, 8
          %s693 = scalar_lea.hbm %s8, %s692
          %s694 = sshll.u32 %s668, 4
          %s695 = int_to_ptr.vmem [resolvable:$true] %s694
          %s696 = sshll.u32 %s693, 4
          %s697 = int_to_ptr.hbm [resolvable:$true] %s696
          %702 = dma.vmem_to_hbm [thread:$0]  %s695, 256, %s697, %s665, 128, 128, 8
        $region72: #{tpu_custom_call.1} parent=47 // pred_fallthru
          _
      $region48: #{tpu_custom_call.1} parent=5 // pred_fallthru
        _
      %p703 = scmp.le.s32.totalorder 2, %s26
      // Predicated region
      $region73: #{tpu_custom_call.1} parent=5 // pred_check
        %p704 = pneg %p703
      $region74: #{tpu_custom_call.1} parent=5 // pred_check_branch
        %706 = sbr.rel (%p704) target = $region76
      $region75: #{tpu_custom_call.1} parent=5 // pred_region
        %s707 = ssub.s32 %s26, 2
        // Predicated region
        $region77: #{tpu_custom_call.1} parent=75 // pred_check
          %p708 = pneg %p207
        $region78: #{tpu_custom_call.1} parent=75 // pred_check_branch
          %710 = sbr.rel (%p708) target = $region80
        $region79: #{tpu_custom_call.1} parent=75 // pred_region
          %s711 = sand.u32 %s192, 1
          %s712 = scalar_lea.sflag [#allocation4], %s711
          %s713 = sand.u32 %s192, 1
          %s714 = smul.addr %s713, 8
          %s715 = scalar_lea.vmem [#allocation10], %s714
          %717 = dma.done %s712, 128
        $region80: #{tpu_custom_call.1} parent=75 // pred_fallthru
          _
        // Predicated region
        $region81: #{tpu_custom_call.1} parent=75 // pred_check
          %p718 = pneg %p233
        $region82: #{tpu_custom_call.1} parent=75 // pred_check_branch
          %720 = sbr.rel (%p718) target = $region84
        $region83: #{tpu_custom_call.1} parent=75 // pred_region
          %s721 = sand.u32 %s218, 1
          %s722 = scalar_lea.sflag [#allocation12], %s721
          %s723 = sand.u32 %s218, 1
          %s724 = smul.addr %s723, 16
          %s725 = scalar_lea.vmem [#allocation11], %s724
          %727 = dma.done %s722, 256
        $region84: #{tpu_custom_call.1} parent=75 // pred_fallthru
          _
      $region76: #{tpu_custom_call.1} parent=5 // pred_fallthru
        _
    $region6: #{tpu_custom_call.1} parent=1 // loop_footer
      %s30 = sadd.s32 1, %s26
    $region7: #{tpu_custom_call.1} parent=1 // loop_footer_branch
      %25 = sbr.rel target = $region3
    $region8: #{tpu_custom_call.1} parent=1 // loop_exit
      _
    %728 = vsyncpa [#allocation3], 1
    %s729 = scalar_lea.sflag [#allocation3], 1
    %730 = vsyncpa %s729, 1
    %731 = vsyncpa [#allocation6], 1
    %732 = vsyncpa [#allocation9], 1
    %733 = vsyncpa [#allocation4], 1
    %s734 = scalar_lea.sflag [#allocation4], 1
    %735 = vsyncpa %s734, 1
    %736 = vsyncpa [#allocation12], 1
    %s737 = scalar_lea.sflag [#allocation12], 1
    %738 = vsyncpa %s737, 1

</llo_original>
